<compile_context>
chip_gen: v7x
topology: tpu7x:2x2x1
jax: 0.10.0
libtpu: 0.0.40
codegen_flags: <defaults>
</compile_context>

<pallas_src>
import functools
import math

import jax
import jax.numpy as jnp
from jax.experimental import pallas as pl
from jax.experimental.pallas import tpu as pltpu


# ---------------------------------------------------------------------------
# Kernel
# ---------------------------------------------------------------------------
def ff_geglu_kernel(x_ref, w1_ref, b1_ref, w2_ref, b2_ref, o_ref, acc_ref, *, th):
    """One (tm x dim) token tile, one hidden tile of width th.

    Grid = (num_m, n_h); the hidden axis (last, "arbitrary") is a reduction
    into the f32 accumulator scratch; output is written on the last h step.
    """
    h = pl.program_id(1)

    @pl.when(h == 0)
    def _init():
        acc_ref[...] = jnp.zeros_like(acc_ref)

    # Fused first linear: one MXU op producing [a | g] for this hidden tile.
    x = x_ref[...].astype(w1_ref.dtype)
    hz = jnp.dot(x, w1_ref[...], preferred_element_type=jnp.float32)
    hz = hz + b1_ref[...]                       # (tm, 2*th), f32

    a = hz[:, :th]
    g = hz[:, th:]

    # GEGLU: a * gelu(g), exact erf-based GELU (matches torch F.gelu default).
    inv_sqrt2 = 1.0 / math.sqrt(2.0)
    gelu_g = 0.5 * g * (1.0 + jax.lax.erf(g * inv_sqrt2))
    u = (a * gelu_g).astype(w2_ref.dtype)

    # Second linear: partial contribution of this hidden tile, accumulated f32.
    acc_ref[...] += jnp.dot(u, w2_ref[...], preferred_element_type=jnp.float32)

    @pl.when(h == pl.num_programs(1) - 1)
    def _finalize():
        o_ref[...] = (acc_ref[...] + b2_ref[...].astype(jnp.float32)).astype(o_ref.dtype)


# ---------------------------------------------------------------------------
# Wrapper helpers
# ---------------------------------------------------------------------------
def _round_up(a, b):
    return ((a + b - 1) // b) * b


def _auto_th(dim, hidden, wbytes, budget=32 << 20):
    """Largest hidden-tile width (multiple of 128, dividing hidden) that keeps
    the per-step resident weight tiles under `budget` bytes."""
    def fits(t):
        # w1 tile (dim x 2t) + w2 tile (t x dim), assume double-buffered.
        return dim * 3 * t * wbytes * 2 <= budget

    if fits(hidden):
        return hidden
    best = hidden
    cand = (hidden // 128) * 128
    while cand >= 128:
        if hidden % cand == 0:
            best = cand
            if fits(cand):
                return cand
        cand -= 128
    return best


def _vmem_need_bytes(tm, dim, th, n_h, wbytes, xbytes, obytes):
    wbuf = 1 if n_h == 1 else 2
    return (2 * tm * dim * xbytes            # x tiles (double-buffered)
            + wbuf * dim * 2 * th * wbytes   # w1 tile(s)
            + wbuf * 2 * th * 4              # b1 tile(s)
            + wbuf * th * dim * wbytes       # w2 tile(s)
            + dim * 4                        # b2 (single-buffered)
            + 2 * tm * dim * obytes          # out tiles
            + tm * dim * 4)                  # f32 accumulator scratch


def _pack_w1(params, th):
    """Reorder W1/b1 columns so hidden tile h occupies one contiguous
    [a_tile | g_tile] block of 2*th columns (enables the fused GEMM + tiling)."""
    dim, hidden = params["w1a"].shape
    n_h = hidden // th
    w1 = jnp.concatenate(
        [params["w1a"].reshape(dim, n_h, th),
         params["w1b"].reshape(dim, n_h, th)], axis=2,
    ).reshape(dim, n_h * 2 * th)
    b1 = jnp.concatenate(
        [params["b1a"].astype(jnp.float32).reshape(1, n_h, th),
         params["b1b"].astype(jnp.float32).reshape(1, n_h, th)], axis=2,
    ).reshape(1, n_h * 2 * th)
    return w1, b1


# ---------------------------------------------------------------------------
# Public entry point
# ---------------------------------------------------------------------------
def feed_forward(x, params, *, tm=256, th=None):
    """x: (B, N, dim).  params: dict of pre-transposed weights/biases."""
    B, N, dim = x.shape
    M = B * N
    hidden = params["w1a"].shape[1]
    wdtype = params["w1a"].dtype
    wbytes = jnp.dtype(wdtype).itemsize
    xbytes = jnp.dtype(x.dtype).itemsize

    # --- M tiling: clamp the tile for tiny M, pad ragged M. ---
    tm_eff = min(tm, _round_up(M, 8))
    m_pad = _round_up(M, tm_eff)
    num_m = m_pad // tm_eff

    # --- hidden tiling (columns of W1 / rows of W2). ---
    if th is None:
        th = _auto_th(dim, hidden, wbytes)
    assert hidden % th == 0, f"hidden={hidden} must be divisible by th={th}"
    n_h = hidden // th
    all_resident = n_h == 1

    x2d = x.reshape(M, dim)
    if m_pad != M:
        x2d = jnp.pad(x2d, ((0, m_pad - M), (0, 0)))

    # NOTE: in production this packing would be done once at weight-load time.
    w1, b1 = _pack_w1(params, th)
    w2 = params["w2"]
    b2 = params["b2"].astype(jnp.float32)

    def spec(shape, imap, single_buffer):
        if single_buffer:
            # Grid-constant operand: single-buffer to halve its VMEM footprint.
            return pl.BlockSpec(shape, imap, pipeline_mode=pl.Buffered(1))
        return pl.BlockSpec(shape, imap)

    need = _vmem_need_bytes(tm_eff, dim, th, n_h, wbytes, xbytes, xbytes)
    vmem_limit = int(min(max(int(need * 1.5) + (4 << 20), 32 << 20), 100 << 20))

    kernel = functools.partial(ff_geglu_kernel, th=th)

    out = pl.pallas_call(
        kernel,
        out_shape=jax.ShapeDtypeStruct((m_pad, dim), x.dtype),
        grid_spec=pltpu.PrefetchScalarGridSpec(
            num_scalar_prefetch=0,
            grid=(num_m, n_h),
            in_specs=[
                pl.BlockSpec((tm_eff, dim), lambda i, h: (i, 0)),          # x tile
                spec((dim, 2 * th), lambda i, h: (0, h), all_resident),    # W1 tile [a|g]
                spec((1, 2 * th), lambda i, h: (0, h), all_resident),      # b1 tile
                spec((th, dim), lambda i, h: (h, 0), all_resident),        # W2 tile
                spec((1, dim), lambda i, h: (0, 0), True),                 # b2 (constant)
            ],
            out_specs=pl.BlockSpec((tm_eff, dim), lambda i, h: (i, 0)),
            scratch_shapes=[pltpu.VMEM((tm_eff, dim), jnp.float32)],
        ),
        compiler_params=pltpu.CompilerParams(
            dimension_semantics=("parallel", "arbitrary"),
            vmem_limit_bytes=vmem_limit,
        ),
    )(x2d, w1, b1, w2, b2)

    if m_pad != M:
        out = out[:M]
    return out.reshape(B, N, dim)


# ---------------------------------------------------------------------------
# Params / reference
# ---------------------------------------------------------------------------
def init_feed_forward_params(key, dim, mult=4.0, dtype=jnp.float32):
    """Deterministic init mirroring nn.Linear's U(-1/sqrt(fan_in), 1/sqrt(fan_in))."""
    hidden = int(dim * mult)
    inner = 2 * hidden
    k1, k2, k3, k4 = jax.random.split(key, 4)

    bound1 = 1.0 / math.sqrt(dim)
    # PyTorch Linear weight is (out, in); we store its transpose (in, out).
    w1_t = jax.random.uniform(k1, (dim, inner), dtype, -bound1, bound1)
    b1 = jax.random.uniform(k2, (1, inner), dtype, -bound1, bound1)

    bound2 = 1.0 / math.sqrt(hidden)
    w2_t = jax.random.uniform(k3, (hidden, dim), dtype, -bound2, bound2)
    b2 = jax.random.uniform(k4, (1, dim), dtype, -bound2, bound2)

    return {
        # chunk(2, dim=-1) on the first linear's output == split its columns.
        "w1a": w1_t[:, :hidden],
        "b1a": b1[:, :hidden],
        "w1b": w1_t[:, hidden:],
        "b1b": b1[:, hidden:],
        "w2": w2_t,
        "b2": b2,
    }


def params_to_bf16(params):
    """Cast weight matrices to bf16 (biases stay f32); accumulation stays f32."""
    out = dict(params)
    for k in ("w1a", "w1b", "w2"):
        out[k] = params[k].astype(jnp.bfloat16)
    return out


def feed_forward_ref(x, params):
    """Pure-JAX (f32, highest precision) reference for correctness checking."""
    B, N, dim = x.shape
    f32 = jnp.float32
    x2d = x.reshape(B * N, dim).astype(f32)
    a = jnp.dot(x2d, params["w1a"].astype(f32), precision="highest") + params["b1a"].astype(f32)
    g = jnp.dot(x2d, params["w1b"].astype(f32), precision="highest") + params["b1b"].astype(f32)
    u = a * (0.5 * g * (1.0 + jax.lax.erf(g / math.sqrt(2.0))))
    y = jnp.dot(u, params["w2"].astype(f32), precision="highest") + params["b2"].astype(f32)
    return y.reshape(B, N, dim).astype(x.dtype)


# ---------------------------------------------------------------------------
# Self-test
# ---------------------------------------------------------------------------
if __name__ == "__main__":
    B, N, dim = 2, 9, 128          # M = 18 (ragged -> exercises padding), hidden = 512
    key = jax.random.PRNGKey(0)
    kx, kp = jax.random.split(key)

    x = jax.random.normal(kx, (B, N, dim), dtype=jnp.float32)
    params = init_feed_forward_params(kp, dim, mult=4.0)

    y_ref = feed_forward_ref(x, params)

    # 1) f32, all weights resident (single hidden block, single-buffered weights).
    y1 = jax.block_until_ready(feed_forward(x, params))
    assert y1.shape == (B, N, dim)
    assert jnp.allclose(y1, y_ref, atol=2e-2, rtol=2e-2)

    # 2) hidden-axis accumulator tiling (th=256 -> 2 hidden blocks, P3 pattern).
    y2 = jax.block_until_ready(feed_forward(x, params, th=256))
    assert jnp.allclose(y2, y_ref, atol=2e-2, rtol=2e-2)

    # 3) bf16 weights / activations with f32 accumulation (looser tolerance).
    y3 = jax.block_until_ready(feed_forward(x, params_to_bf16(params)))
    assert jnp.allclose(y3, y_ref, atol=6e-2, rtol=6e-2)

    print("KERNEL_OK")
</pallas_src>

<mosaic_0001>
module attributes {stable_mosaic.version = 11 : i64} {
  func.func @ff_geglu_kernel(%arg0: i32, %arg1: i32, %arg2: memref<24x128xf32, #tpu.memory_space<vmem>>, %arg3: memref<128x1024xf32, #tpu.memory_space<vmem>>, %arg4: memref<1x1024xf32, #tpu.memory_space<vmem>>, %arg5: memref<512x128xf32, #tpu.memory_space<vmem>>, %arg6: memref<1x128xf32, #tpu.memory_space<vmem>>, %arg7: memref<24x128xf32, #tpu.memory_space<vmem>>, %arg8: memref<24x128xf32, #tpu.memory_space<vmem>>) attributes {dimension_semantics = [#tpu.dimension_semantics<parallel>, #tpu.dimension_semantics<arbitrary>], iteration_bounds = array<i64: 1, 1>, scalar_prefetch = 0 : i64, scratch_operands = 1 : i64, tpu.core_type = #tpu.core_type<tc>, window_params = [{transform_indices = @transform_0, window_bounds = array<i64: 24, 128>}, {pipeline_mode = #tpu.pipeline_mode<synchronous>, transform_indices = @transform_1, window_bounds = array<i64: 128, 1024>}, {pipeline_mode = #tpu.pipeline_mode<synchronous>, transform_indices = @transform_2, window_bounds = array<i64: 1, 1024>}, {pipeline_mode = #tpu.pipeline_mode<synchronous>, transform_indices = @transform_3, window_bounds = array<i64: 512, 128>}, {pipeline_mode = #tpu.pipeline_mode<synchronous>, transform_indices = @transform_4, window_bounds = array<i64: 1, 128>}, {transform_indices = @transform_5, window_bounds = array<i64: 24, 128>}]} {
    %c0_i32 = arith.constant 0 : i32
    %0 = arith.cmpi eq, %arg1, %c0_i32 : i32
    %1 = arith.extui %0 : i1 to i32
    %c0_i32_0 = arith.constant 0 : i32
    %2 = arith.cmpi ne, %1, %c0_i32_0 : i32
    scf.if %2 {
      %cst_18 = arith.constant 0.000000e+00 : f32
      %28 = vector.broadcast %cst_18 : f32 to vector<24x128xf32>
      %c0_19 = arith.constant 0 : index
      %c0_20 = arith.constant 0 : index
      %29 = vector.load %arg8[%c0_19, %c0_20] : memref<24x128xf32, #tpu.memory_space<vmem>>, vector<24x128xf32>
      tpu.vector_store %arg8[%c0_19, %c0_20], %28 {strides = array<i32>} : memref<24x128xf32, #tpu.memory_space<vmem>>, vector<24x128xf32>,
    } else {
    }
    %c0 = arith.constant 0 : index
    %c0_1 = arith.constant 0 : index
    %3 = vector.load %arg2[%c0, %c0_1] : memref<24x128xf32, #tpu.memory_space<vmem>>, vector<24x128xf32>
    %c0_2 = arith.constant 0 : index
    %c0_3 = arith.constant 0 : index
    %4 = vector.load %arg3[%c0_2, %c0_3] : memref<128x1024xf32, #tpu.memory_space<vmem>>, vector<128x1024xf32>
    %cst = arith.constant dense<0.000000e+00> : vector<24x1024xf32>
    %5 = tpu.matmul %3, %4, %cst {dimension_numbers = #tpu.dot_dimension_numbers<[1], [0], [0], [1], [0, 0, 1, 1], [], []>} : vector<24x128xf32>, vector<128x1024xf32>, vector<24x1024xf32> -> vector<24x1024xf32>
    %c0_4 = arith.constant 0 : index
    %c0_5 = arith.constant 0 : index
    %6 = vector.load %arg4[%c0_4, %c0_5] : memref<1x1024xf32, #tpu.memory_space<vmem>>, vector<1x1024xf32>
    %7 = vector.broadcast %6 : vector<1x1024xf32> to vector<24x1024xf32>
    %8 = arith.addf %5, %7 : vector<24x1024xf32>
    %9 = vector.extract_strided_slice %8 {offsets = [0, 0], sizes = [24, 512], strides = [1, 1]} : vector<24x1024xf32> to vector<24x512xf32>
    %10 = vector.extract_strided_slice %8 {offsets = [0, 512], sizes = [24, 512], strides = [1, 1]} : vector<24x1024xf32> to vector<24x512xf32>
    %cst_6 = arith.constant 5.000000e-01 : f32
    %11 = vector.broadcast %cst_6 : f32 to vector<24x512xf32>
    %12 = arith.mulf %11, %10 : vector<24x512xf32>
    %cst_7 = arith.constant 0.707106769 : f32
    %13 = vector.broadcast %cst_7 : f32 to vector<24x512xf32>
    %14 = arith.mulf %10, %13 : vector<24x512xf32>
    %15 = math.erf %14 : vector<24x512xf32>
    %cst_8 = arith.constant 1.000000e+00 : f32
    %16 = vector.broadcast %cst_8 : f32 to vector<24x512xf32>
    %17 = arith.addf %16, %15 : vector<24x512xf32>
    %18 = arith.mulf %12, %17 : vector<24x512xf32>
    %19 = arith.mulf %9, %18 : vector<24x512xf32>
    %c0_9 = arith.constant 0 : index
    %c0_10 = arith.constant 0 : index
    %20 = vector.load %arg8[%c0_9, %c0_10] : memref<24x128xf32, #tpu.memory_space<vmem>>, vector<24x128xf32>
    %c0_11 = arith.constant 0 : index
    %c0_12 = arith.constant 0 : index
    %21 = vector.load %arg5[%c0_11, %c0_12] : memref<512x128xf32, #tpu.memory_space<vmem>>, vector<512x128xf32>
    %cst_13 = arith.constant dense<0.000000e+00> : vector<24x128xf32>
    %22 = tpu.matmul %19, %21, %cst_13 {dimension_numbers = #tpu.dot_dimension_numbers<[1], [0], [0], [1], [0, 0, 1, 1], [], []>} : vector<24x512xf32>, vector<512x128xf32>, vector<24x128xf32> -> vector<24x128xf32>
    %23 = arith.addf %20, %22 : vector<24x128xf32>
    %c0_14 = arith.constant 0 : index
    %c0_15 = arith.constant 0 : index
    %24 = vector.load %arg8[%c0_14, %c0_15] : memref<24x128xf32, #tpu.memory_space<vmem>>, vector<24x128xf32>
    tpu.vector_store %arg8[%c0_14, %c0_15], %23 {strides = array<i32>} : memref<24x128xf32, #tpu.memory_space<vmem>>, vector<24x128xf32>,
    %c0_i32_16 = arith.constant 0 : i32
    %25 = arith.cmpi eq, %arg1, %c0_i32_16 : i32
    %26 = arith.extui %25 : i1 to i32
    %c0_i32_17 = arith.constant 0 : i32
    %27 = arith.cmpi ne, %26, %c0_i32_17 : i32
    scf.if %27 {
      %c0_18 = arith.constant 0 : index
      %c0_19 = arith.constant 0 : index
      %28 = vector.load %arg8[%c0_18, %c0_19] : memref<24x128xf32, #tpu.memory_space<vmem>>, vector<24x128xf32>
      %c0_20 = arith.constant 0 : index
      %c0_21 = arith.constant 0 : index
      %29 = vector.load %arg6[%c0_20, %c0_21] : memref<1x128xf32, #tpu.memory_space<vmem>>, vector<1x128xf32>
      %30 = vector.broadcast %29 : vector<1x128xf32> to vector<24x128xf32>
      %31 = arith.addf %28, %30 : vector<24x128xf32>
      %c0_22 = arith.constant 0 : index
      %c0_23 = arith.constant 0 : index
      %32 = vector.load %arg7[%c0_22, %c0_23] : memref<24x128xf32, #tpu.memory_space<vmem>>, vector<24x128xf32>
      tpu.vector_store %arg7[%c0_22, %c0_23], %31 {strides = array<i32>} : memref<24x128xf32, #tpu.memory_space<vmem>>, vector<24x128xf32>,
    } else {
    }
    return
  }
  func.func @transform_0(%arg0: i32, %arg1: i32) -> (i32, i32) {
    %c0_i32 = arith.constant 0 : i32
    %c0_i32_0 = arith.constant 0 : i32
    return %arg0, %c0_i32 : i32, i32
  }
  func.func @transform_1(%arg0: i32, %arg1: i32) -> (i32, i32) {
    %c0_i32 = arith.constant 0 : i32
    %c0_i32_0 = arith.constant 0 : i32
    return %c0_i32, %arg1 : i32, i32
  }
  func.func @transform_2(%arg0: i32, %arg1: i32) -> (i32, i32) {
    %c0_i32 = arith.constant 0 : i32
    %c0_i32_0 = arith.constant 0 : i32
    return %c0_i32, %arg1 : i32, i32
  }
  func.func @transform_3(%arg0: i32, %arg1: i32) -> (i32, i32) {
    %c0_i32 = arith.constant 0 : i32
    %c0_i32_0 = arith.constant 0 : i32
    return %arg1, %c0_i32 : i32, i32
  }
  func.func @transform_4(%arg0: i32, %arg1: i32) -> (i32, i32) {
    %c0_i32 = arith.constant 0 : i32
    %c0_i32_0 = arith.constant 0 : i32
    %c0_i32_1 = arith.constant 0 : i32
    return %c0_i32, %c0_i32_0 : i32, i32
  }
  func.func @transform_5(%arg0: i32, %arg1: i32) -> (i32, i32) {
    %c0_i32 = arith.constant 0 : i32
    %c0_i32_0 = arith.constant 0 : i32
    return %arg0, %c0_i32 : i32, i32
  }
}

</mosaic_0001>

<llo_original>
// kernel: tpu_custom_call.1
$region0: #{tpu_custom_call.1}
  #allocation0 [shape = 'u32[]', space=smem, size = 0x4, offset = 0x4, fixed_abs, tag = 'smem constant byte address 0x4 - core index']
  #allocation1 [shape = 'u32[144,128]{1,0:T(1,128)}', space=vmem, size = 0x12000, scoped, tag = 'internal scratch']
  #allocation2 [shape = 'f32[24,128]{1,0:T(8,128)}', space=vmem, size = 0x3000, scoped, tag = 'scratch operand']
  %s0 = inlined_call_operand.hbm [shape: f32[24,128], index: 0, kind: input, shape index: {}]
  %s1 = inlined_call_operand.hbm [shape: f32[128,1024], index: 1, kind: input, shape index: {}]
  %s2 = inlined_call_operand.hbm [shape: f32[1,1024], index: 2, kind: input, shape index: {}]
  %s3 = inlined_call_operand.hbm [shape: f32[512,128], index: 3, kind: input, shape index: {}]
  %s4 = inlined_call_operand.vmem [shape: f32[1,128], index: 4, kind: input, shape index: {}]
  %s5 = inlined_call_operand.hbm [shape: f32[24,128], index: 5, kind: output, shape index: {}]
  %s6 = sld [smem:[#allocation0]]
  $region54: #{tpu_custom_call.1} parent=0
    _
  %s8 = ssub.s32 1, %s6
  %s9 = scalar_select 0, %s8, %s6
  $region1: #{tpu_custom_call.1} parent=0
    #allocation3 [shape = 'u8[12288]{0}', space=vmem, size = 0x3000, scoped, tag = 'input window, operand 0, single buffered']
    #allocation4 [shape = 's32[1]{0}', space=sflag, size = 0x4, scoped, tag = 'scoped memory for tpu_custom_call.1']
    #allocation5 [shape = 's32[1]{0}', space=sflag, size = 0x4, scoped, tag = 'scoped memory for tpu_custom_call.1']
    #allocation6 [shape = 'u8[524288]{0}', space=vmem, size = 0x80000, scoped, tag = 'input window, operand 1, single buffered']
    #allocation7 [shape = 's32[1]{0}', space=sflag, size = 0x4, scoped, tag = 'scoped memory for tpu_custom_call.1']
    #allocation8 [shape = 'u8[4096]{0}', space=vmem, size = 0x1000, scoped, tag = 'input window, operand 2, single buffered']
    #allocation9 [shape = 'u8[262144]{0}', space=vmem, size = 0x40000, scoped, tag = 'input window, operand 3, single buffered']
    #allocation10 [shape = 's32[1]{0}', space=sflag, size = 0x4, scoped, tag = 'scoped memory for tpu_custom_call.1']
    #allocation11 [shape = 'u8[12288]{0}', space=vmem, size = 0x3000, scoped, tag = 'output window, operand 0, single buffered']
    %10 = vsyncpa [#allocation4], 0
    %11 = vsyncpa [#allocation7], 0
    %12 = vsyncpa [#allocation10], 0
    %13 = vsyncpa [#allocation5], 0
    // Predicated region
    $region2: #{tpu_custom_call.1} parent=1 // pred_check
      _
    $region3: #{tpu_custom_call.1} parent=1 // pred_check_branch
      %15 = sbr.rel (0) target = $region5
    $region4: #{tpu_custom_call.1} parent=1 // pred_region
      %s17 = ssub.s32 384, 384
      %18 = vsyncadd [#allocation4], %s17
      %s19 = sshll.u32 [#allocation3], 4
      %s20 = int_to_ptr.vmem [resolvable:$true] %s19
      %25 = dma.hbm_to_vmem [thread:$0]  %s0, 384, %s20, [#allocation4], 128, 128, 8
    $region5: #{tpu_custom_call.1} parent=1 // pred_fallthru
      _
    // Predicated region
    $region6: #{tpu_custom_call.1} parent=1 // pred_check
      _
    $region7: #{tpu_custom_call.1} parent=1 // pred_check_branch
      %27 = sbr.rel (0) target = $region9
    $region8: #{tpu_custom_call.1} parent=1 // pred_region
      %s29 = ssub.s32 16384, 16384
      %30 = vsyncadd [#allocation7], %s29
      %s31 = sshll.u32 [#allocation6], 4
      %s32 = int_to_ptr.vmem [resolvable:$true] %s31
      %37 = dma.hbm_to_vmem [thread:$0]  %s1, 16384, %s32, [#allocation7], 1024, 1024, 64
    $region9: #{tpu_custom_call.1} parent=1 // pred_fallthru
      _
    // Predicated region
    $region10: #{tpu_custom_call.1} parent=1 // pred_check
      _
    $region11: #{tpu_custom_call.1} parent=1 // pred_check_branch
      %39 = sbr.rel (0) target = $region13
    $region12: #{tpu_custom_call.1} parent=1 // pred_region
      %s41 = ssub.s32 128, 128
      %42 = vsyncadd [#allocation7], %s41
      %s44 = sshll.u32 [#allocation8], 4
      %s45 = int_to_ptr.vmem [resolvable:$true] %s44
      %47 = dma.hbm_to_vmem [thread:$0]  %s2, 128, %s45, [#allocation7]
    $region13: #{tpu_custom_call.1} parent=1 // pred_fallthru
      _
    // Predicated region
    $region14: #{tpu_custom_call.1} parent=1 // pred_check
      _
    $region15: #{tpu_custom_call.1} parent=1 // pred_check_branch
      %49 = sbr.rel (0) target = $region17
    $region16: #{tpu_custom_call.1} parent=1 // pred_region
      %s51 = ssub.s32 8192, 8192
      %52 = vsyncadd [#allocation10], %s51
      %s53 = sshll.u32 [#allocation9], 4
      %s54 = int_to_ptr.vmem [resolvable:$true] %s53
      %59 = dma.hbm_to_vmem [thread:$0]  %s3, 8192, %s54, [#allocation10], 128, 128, 8
    $region17: #{tpu_custom_call.1} parent=1 // pred_fallthru
      _
    // Predicated region
    $region18: #{tpu_custom_call.1} parent=1 // pred_check
      _
    $region19: #{tpu_custom_call.1} parent=1 // pred_check_branch
      %61 = sbr.rel (0) target = $region21
    $region20: #{tpu_custom_call.1} parent=1 // pred_region
      _
    $region21: #{tpu_custom_call.1} parent=1 // pred_fallthru
      _
    // Predicated region
    $region22: #{tpu_custom_call.1} parent=1 // pred_check
      _
    $region23: #{tpu_custom_call.1} parent=1 // pred_check_branch
      %63 = sbr.rel (0) target = $region25
    $region24: #{tpu_custom_call.1} parent=1 // pred_region
      %64 = dma.done [#allocation4], 384
    $region25: #{tpu_custom_call.1} parent=1 // pred_fallthru
      _
    // Predicated region
    $region26: #{tpu_custom_call.1} parent=1 // pred_check
      _
    $region27: #{tpu_custom_call.1} parent=1 // pred_check_branch
      %66 = sbr.rel (0) target = $region29
    $region28: #{tpu_custom_call.1} parent=1 // pred_region
      %67 = dma.done [#allocation7], 16384
    $region29: #{tpu_custom_call.1} parent=1 // pred_fallthru
      _
    // Predicated region
    $region30: #{tpu_custom_call.1} parent=1 // pred_check
      _
    $region31: #{tpu_custom_call.1} parent=1 // pred_check_branch
      %69 = sbr.rel (0) target = $region33
    $region32: #{tpu_custom_call.1} parent=1 // pred_region
      %70 = dma.done [#allocation7], 128
    $region33: #{tpu_custom_call.1} parent=1 // pred_fallthru
      _
    // Predicated region
    $region34: #{tpu_custom_call.1} parent=1 // pred_check
      _
    $region35: #{tpu_custom_call.1} parent=1 // pred_check_branch
      %72 = sbr.rel (0) target = $region37
    $region36: #{tpu_custom_call.1} parent=1 // pred_region
      %73 = dma.done [#allocation10], 8192
    $region37: #{tpu_custom_call.1} parent=1 // pred_fallthru
      _
    %p74 = scmp.eq.s32.totalorder 0, 0
    // Predicated region
    $region38: #{tpu_custom_call.1} parent=1 // pred_check
      %p75 = pneg %p74
    $region39: #{tpu_custom_call.1} parent=1 // pred_check_branch
      %77 = sbr.rel (%p75) target = $region41
    $region40: #{tpu_custom_call.1} parent=1 // pred_region
      %78 = vst [vmem:[#allocation2] sm:$0xff] 0.0
      %79 = vst [vmem:[#allocation2 + $0x8] sm:$0xff] 0.0
      %80 = vst [vmem:[#allocation2 + $0x10] sm:$0xff] 0.0
    $region41: #{tpu_custom_call.1} parent=1 // pred_fallthru
      _
    %v81 = vld [vmem:[#allocation3] sm:$0xff]
    %v82 = vld [vmem:[#allocation3 + $0x8] sm:$0xff]
    %v83 = vld [vmem:[#allocation3 + $0x10] sm:$0xff]
    %v84 = vld [vmem:[#allocation6] sm:$0xff]
    %v85 = vld [vmem:[#allocation6 + $0x8] sm:$0xff]
    %v86 = vld [vmem:[#allocation6 + $0x10] sm:$0xff]
    %v87 = vld [vmem:[#allocation6 + $0x18] sm:$0xff]
    %v88 = vld [vmem:[#allocation6 + $0x20] sm:$0xff]
    %v89 = vld [vmem:[#allocation6 + $0x28] sm:$0xff]
    %v90 = vld [vmem:[#allocation6 + $0x30] sm:$0xff]
    %v91 = vld [vmem:[#allocation6 + $0x38] sm:$0xff]
    %v92 = vld [vmem:[#allocation6 + $0x40] sm:$0xff]
    %v93 = vld [vmem:[#allocation6 + $0x48] sm:$0xff]
    %v94 = vld [vmem:[#allocation6 + $0x50] sm:$0xff]
    %v95 = vld [vmem:[#allocation6 + $0x58] sm:$0xff]
    %v96 = vld [vmem:[#allocation6 + $0x60] sm:$0xff]
    %v97 = vld [vmem:[#allocation6 + $0x68] sm:$0xff]
    %v98 = vld [vmem:[#allocation6 + $0x70] sm:$0xff]
    %v99 = vld [vmem:[#allocation6 + $0x78] sm:$0xff]
    %v100 = vld [vmem:[#allocation6 + $0x80] sm:$0xff]
    %v101 = vld [vmem:[#allocation6 + $0x88] sm:$0xff]
    %v102 = vld [vmem:[#allocation6 + $0x90] sm:$0xff]
    %v103 = vld [vmem:[#allocation6 + $0x98] sm:$0xff]
    %v104 = vld [vmem:[#allocation6 + $0xa0] sm:$0xff]
    %v105 = vld [vmem:[#allocation6 + $0xa8] sm:$0xff]
    %v106 = vld [vmem:[#allocation6 + $0xb0] sm:$0xff]
    %v107 = vld [vmem:[#allocation6 + $0xb8] sm:$0xff]
    %v108 = vld [vmem:[#allocation6 + $0xc0] sm:$0xff]
    %v109 = vld [vmem:[#allocation6 + $0xc8] sm:$0xff]
    %v110 = vld [vmem:[#allocation6 + $0xd0] sm:$0xff]
    %v111 = vld [vmem:[#allocation6 + $0xd8] sm:$0xff]
    %v112 = vld [vmem:[#allocation6 + $0xe0] sm:$0xff]
    %v113 = vld [vmem:[#allocation6 + $0xe8] sm:$0xff]
    %v114 = vld [vmem:[#allocation6 + $0xf0] sm:$0xff]
    %v115 = vld [vmem:[#allocation6 + $0xf8] sm:$0xff]
    %v116 = vld [vmem:[#allocation6 + $0x100] sm:$0xff]
    %v117 = vld [vmem:[#allocation6 + $0x108] sm:$0xff]
    %v118 = vld [vmem:[#allocation6 + $0x110] sm:$0xff]
    %v119 = vld [vmem:[#allocation6 + $0x118] sm:$0xff]
    %v120 = vld [vmem:[#allocation6 + $0x120] sm:$0xff]
    %v121 = vld [vmem:[#allocation6 + $0x128] sm:$0xff]
    %v122 = vld [vmem:[#allocation6 + $0x130] sm:$0xff]
    %v123 = vld [vmem:[#allocation6 + $0x138] sm:$0xff]
    %v124 = vld [vmem:[#allocation6 + $0x140] sm:$0xff]
    %v125 = vld [vmem:[#allocation6 + $0x148] sm:$0xff]
    %v126 = vld [vmem:[#allocation6 + $0x150] sm:$0xff]
    %v127 = vld [vmem:[#allocation6 + $0x158] sm:$0xff]
    %v128 = vld [vmem:[#allocation6 + $0x160] sm:$0xff]
    %v129 = vld [vmem:[#allocation6 + $0x168] sm:$0xff]
    %v130 = vld [vmem:[#allocation6 + $0x170] sm:$0xff]
    %v131 = vld [vmem:[#allocation6 + $0x178] sm:$0xff]
    %v132 = vld [vmem:[#allocation6 + $0x180] sm:$0xff]
    %v133 = vld [vmem:[#allocation6 + $0x188] sm:$0xff]
    %v134 = vld [vmem:[#allocation6 + $0x190] sm:$0xff]
    %v135 = vld [vmem:[#allocation6 + $0x198] sm:$0xff]
    %v136 = vld [vmem:[#allocation6 + $0x1a0] sm:$0xff]
    %v137 = vld [vmem:[#allocation6 + $0x1a8] sm:$0xff]
    %v138 = vld [vmem:[#allocation6 + $0x1b0] sm:$0xff]
    %v139 = vld [vmem:[#allocation6 + $0x1b8] sm:$0xff]
    %v140 = vld [vmem:[#allocation6 + $0x1c0] sm:$0xff]
    %v141 = vld [vmem:[#allocation6 + $0x1c8] sm:$0xff]
    %v142 = vld [vmem:[#allocation6 + $0x1d0] sm:$0xff]
    %v143 = vld [vmem:[#allocation6 + $0x1d8] sm:$0xff]
    %v144 = vld [vmem:[#allocation6 + $0x1e0] sm:$0xff]
    %v145 = vld [vmem:[#allocation6 + $0x1e8] sm:$0xff]
    %v146 = vld [vmem:[#allocation6 + $0x1f0] sm:$0xff]
    %v147 = vld [vmem:[#allocation6 + $0x1f8] sm:$0xff]
    %v148 = vld [vmem:[#allocation6 + $0x200] sm:$0xff]
    %v149 = vld [vmem:[#allocation6 + $0x208] sm:$0xff]
    %v150 = vld [vmem:[#allocation6 + $0x210] sm:$0xff]
    %v151 = vld [vmem:[#allocation6 + $0x218] sm:$0xff]
    %v152 = vld [vmem:[#allocation6 + $0x220] sm:$0xff]
    %v153 = vld [vmem:[#allocation6 + $0x228] sm:$0xff]
    %v154 = vld [vmem:[#allocation6 + $0x230] sm:$0xff]
    %v155 = vld [vmem:[#allocation6 + $0x238] sm:$0xff]
    %v156 = vld [vmem:[#allocation6 + $0x240] sm:$0xff]
    %v157 = vld [vmem:[#allocation6 + $0x248] sm:$0xff]
    %v158 = vld [vmem:[#allocation6 + $0x250] sm:$0xff]
    %v159 = vld [vmem:[#allocation6 + $0x258] sm:$0xff]
    %v160 = vld [vmem:[#allocation6 + $0x260] sm:$0xff]
    %v161 = vld [vmem:[#allocation6 + $0x268] sm:$0xff]
    %v162 = vld [vmem:[#allocation6 + $0x270] sm:$0xff]
    %v163 = vld [vmem:[#allocation6 + $0x278] sm:$0xff]
    %v164 = vld [vmem:[#allocation6 + $0x280] sm:$0xff]
    %v165 = vld [vmem:[#allocation6 + $0x288] sm:$0xff]
    %v166 = vld [vmem:[#allocation6 + $0x290] sm:$0xff]
    %v167 = vld [vmem:[#allocation6 + $0x298] sm:$0xff]
    %v168 = vld [vmem:[#allocation6 + $0x2a0] sm:$0xff]
    %v169 = vld [vmem:[#allocation6 + $0x2a8] sm:$0xff]
    %v170 = vld [vmem:[#allocation6 + $0x2b0] sm:$0xff]
    %v171 = vld [vmem:[#allocation6 + $0x2b8] sm:$0xff]
    %v172 = vld [vmem:[#allocation6 + $0x2c0] sm:$0xff]
    %v173 = vld [vmem:[#allocation6 + $0x2c8] sm:$0xff]
    %v174 = vld [vmem:[#allocation6 + $0x2d0] sm:$0xff]
    %v175 = vld [vmem:[#allocation6 + $0x2d8] sm:$0xff]
    %v176 = vld [vmem:[#allocation6 + $0x2e0] sm:$0xff]
    %v177 = vld [vmem:[#allocation6 + $0x2e8] sm:$0xff]
    %v178 = vld [vmem:[#allocation6 + $0x2f0] sm:$0xff]
    %v179 = vld [vmem:[#allocation6 + $0x2f8] sm:$0xff]
    %v180 = vld [vmem:[#allocation6 + $0x300] sm:$0xff]
    %v181 = vld [vmem:[#allocation6 + $0x308] sm:$0xff]
    %v182 = vld [vmem:[#allocation6 + $0x310] sm:$0xff]
    %v183 = vld [vmem:[#allocation6 + $0x318] sm:$0xff]
    %v184 = vld [vmem:[#allocation6 + $0x320] sm:$0xff]
    %v185 = vld [vmem:[#allocation6 + $0x328] sm:$0xff]
    %v186 = vld [vmem:[#allocation6 + $0x330] sm:$0xff]
    %v187 = vld [vmem:[#allocation6 + $0x338] sm:$0xff]
    %v188 = vld [vmem:[#allocation6 + $0x340] sm:$0xff]
    %v189 = vld [vmem:[#allocation6 + $0x348] sm:$0xff]
    %v190 = vld [vmem:[#allocation6 + $0x350] sm:$0xff]
    %v191 = vld [vmem:[#allocation6 + $0x358] sm:$0xff]
    %v192 = vld [vmem:[#allocation6 + $0x360] sm:$0xff]
    %v193 = vld [vmem:[#allocation6 + $0x368] sm:$0xff]
    %v194 = vld [vmem:[#allocation6 + $0x370] sm:$0xff]
    %v195 = vld [vmem:[#allocation6 + $0x378] sm:$0xff]
    %v196 = vld [vmem:[#allocation6 + $0x380] sm:$0xff]
    %v197 = vld [vmem:[#allocation6 + $0x388] sm:$0xff]
    %v198 = vld [vmem:[#allocation6 + $0x390] sm:$0xff]
    %v199 = vld [vmem:[#allocation6 + $0x398] sm:$0xff]
    %v200 = vld [vmem:[#allocation6 + $0x3a0] sm:$0xff]
    %v201 = vld [vmem:[#allocation6 + $0x3a8] sm:$0xff]
    %v202 = vld [vmem:[#allocation6 + $0x3b0] sm:$0xff]
    %v203 = vld [vmem:[#allocation6 + $0x3b8] sm:$0xff]
    %v204 = vld [vmem:[#allocation6 + $0x3c0] sm:$0xff]
    %v205 = vld [vmem:[#allocation6 + $0x3c8] sm:$0xff]
    %v206 = vld [vmem:[#allocation6 + $0x3d0] sm:$0xff]
    %v207 = vld [vmem:[#allocation6 + $0x3d8] sm:$0xff]
    %v208 = vld [vmem:[#allocation6 + $0x3e0] sm:$0xff]
    %v209 = vld [vmem:[#allocation6 + $0x3e8] sm:$0xff]
    %v210 = vld [vmem:[#allocation6 + $0x3f0] sm:$0xff]
    %v211 = vld [vmem:[#allocation6 + $0x3f8] sm:$0xff]
    %v212 = vld [vmem:[#allocation8] sm:$0xff]
    %v214 = vlaneseq
    %v215 = vshrl.u32 %v214, 7
    %v216 = vsub.s32 0, %v215
    %v217 = vrot.slane %v212, %v216
    %v218 = vlaneseq
    %v219 = vshrl.u32 %v218, 7
    %v220 = vsub.s32 1, %v219
    %v221 = vrot.slane %v212, %v220
    %v222 = vlaneseq
    %v223 = vshrl.u32 %v222, 7
    %v224 = vsub.s32 2, %v223
    %v225 = vrot.slane %v212, %v224
    %v226 = vlaneseq
    %v227 = vshrl.u32 %v226, 7
    %v228 = vsub.s32 3, %v227
    %v229 = vrot.slane %v212, %v228
    %v230 = vlaneseq
    %v231 = vshrl.u32 %v230, 7
    %v232 = vsub.s32 4, %v231
    %v233 = vrot.slane %v212, %v232
    %v234 = vlaneseq
    %v235 = vshrl.u32 %v234, 7
    %v236 = vsub.s32 5, %v235
    %v237 = vrot.slane %v212, %v236
    %v238 = vlaneseq
    %v239 = vshrl.u32 %v238, 7
    %v240 = vsub.s32 6, %v239
    %v241 = vrot.slane %v212, %v240
    %v242 = vlaneseq
    %v243 = vshrl.u32 %v242, 7
    %v244 = vsub.s32 7, %v243
    %v245 = vrot.slane %v212, %v244
    %254 = vmatprep.subr.mxu0 %v85
    %255 = vmatpush1.msra.mxu0 %v84
    %256 = vmatprep.subr.mxu0 %v93
    %257 = vmatpush1.msra.mxu0 %v92
    %258 = vmatprep.subr.mxu0 %v101
    %259 = vmatpush1.msra.mxu0 %v100
    %260 = vmatprep.subr.mxu0 %v109
    %261 = vmatpush1.msra.mxu0 %v108
    %262 = vmatprep.subr.mxu0 %v117
    %263 = vmatpush1.msra.mxu0 %v116
    %264 = vmatprep.subr.mxu0 %v125
    %265 = vmatpush1.msra.mxu0 %v124
    %266 = vmatprep.subr.mxu0 %v133
    %267 = vmatpush1.msra.mxu0 %v132
    %268 = vmatprep.subr.mxu0 %v141
    %269 = vmatpush1.msra.mxu0 %v140
    %270 = vmatprep.subr.mxu0 %v149
    %271 = vmatpush1.msra.mxu0 %v148
    %272 = vmatprep.subr.mxu0 %v157
    %273 = vmatpush1.msra.mxu0 %v156
    %274 = vmatprep.subr.mxu0 %v165
    %275 = vmatpush1.msra.mxu0 %v164
    %276 = vmatprep.subr.mxu0 %v173
    %277 = vmatpush1.msra.mxu0 %v172
    %278 = vmatprep.subr.mxu0 %v181
    %279 = vmatpush1.msra.mxu0 %v180
    %280 = vmatprep.subr.mxu0 %v189
    %281 = vmatpush1.msra.mxu0 %v188
    %282 = vmatprep.subr.mxu0 %v197
    %283 = vmatpush1.msra.mxu0 %v196
    %284 = vmatprep.subr.mxu0 %v205
    %285 = vmatpush1.msra.mxu0 %v204
    %286 = vmatprep.subr.mxu0 0.0
    %287 = vmatpush1.msra.mxu0 0.0
    %288 = vmatprep.subr.mxu0 0.0
    %289 = vmatpush1.msra.mxu0 0.0
    %290 = vmatprep.subr.mxu0 0.0
    %291 = vmatpush1.msra.mxu0 0.0
    %292 = vmatprep.subr.mxu0 0.0
    %293 = vmatpush1.msra.mxu0 0.0
    %294 = vmatprep.subr.mxu0 0.0
    %295 = vmatpush1.msra.mxu0 0.0
    %296 = vmatprep.subr.mxu0 0.0
    %297 = vmatpush1.msra.mxu0 0.0
    %298 = vmatprep.subr.mxu0 0.0
    %299 = vmatpush1.msra.mxu0 0.0
    %300 = vmatprep.subr.mxu0 0.0
    %301 = vmatpush1.msra.mxu0 0.0
    %302 = vmatprep.subr.mxu0 0.0
    %303 = vmatpush1.msra.mxu0 0.0
    %304 = vmatprep.subr.mxu0 0.0
    %305 = vmatpush1.msra.mxu0 0.0
    %306 = vmatprep.subr.mxu0 0.0
    %307 = vmatpush1.msra.mxu0 0.0
    %308 = vmatprep.subr.mxu0 0.0
    %309 = vmatpush1.msra.mxu0 0.0
    %310 = vmatprep.subr.mxu0 0.0
    %311 = vmatpush1.msra.mxu0 0.0
    %312 = vmatprep.subr.mxu0 0.0
    %313 = vmatpush1.msra.mxu0 0.0
    %314 = vmatprep.subr.mxu0 0.0
    %315 = vmatpush1.msra.mxu0 0.0
    %316 = vmatprep.subr.mxu0 0.0
    %317 = vmatpush1.msra.mxu0 0.0
    %318 = vmatprep.mubr.f32.mxu0 0.0
    %319 = vmatmul.mubr.f32.gmra.mrb[0].mxu0 %v81
    %v320 = vpop.f32.mrb[0].mxu0
    %v321 = vadd.f32 %v217, %v320
    %v322 = vpop.f32.mrb[0].mxu0
    %v323 = vadd.f32 %v221, %v322
    %324 = vmatprep.mubr.f32.mxu0 0.0
    %325 = vmatmul.mubr.f32.gmra.mrb[0].mxu0 %v82
    %v326 = vpop.f32.mrb[0].mxu0
    %v327 = vadd.f32 %v217, %v326
    %v328 = vpop.f32.mrb[0].mxu0
    %v329 = vadd.f32 %v221, %v328
    %330 = vmatprep.mubr.f32.mxu0 0.0
    %331 = vmatmul.mubr.f32.gmra.mrb[0].mxu0 %v83
    %v332 = vpop.f32.mrb[0].mxu0
    %v333 = vadd.f32 %v217, %v332
    %v334 = vpop.f32.mrb[0].mxu0
    %v335 = vadd.f32 %v221, %v334
    %336 = vdwg.mxu0
    %337 = vmatprep.subr.mxu0 %v87
    %338 = vmatpush1.msra.mxu0 %v86
    %339 = vmatprep.subr.mxu0 %v95
    %340 = vmatpush1.msra.mxu0 %v94
    %341 = vmatprep.subr.mxu0 %v103
    %342 = vmatpush1.msra.mxu0 %v102
    %343 = vmatprep.subr.mxu0 %v111
    %344 = vmatpush1.msra.mxu0 %v110
    %345 = vmatprep.subr.mxu0 %v119
    %346 = vmatpush1.msra.mxu0 %v118
    %347 = vmatprep.subr.mxu0 %v127
    %348 = vmatpush1.msra.mxu0 %v126
    %349 = vmatprep.subr.mxu0 %v135
    %350 = vmatpush1.msra.mxu0 %v134
    %351 = vmatprep.subr.mxu0 %v143
    %352 = vmatpush1.msra.mxu0 %v142
    %353 = vmatprep.subr.mxu0 %v151
    %354 = vmatpush1.msra.mxu0 %v150
    %355 = vmatprep.subr.mxu0 %v159
    %356 = vmatpush1.msra.mxu0 %v158
    %357 = vmatprep.subr.mxu0 %v167
    %358 = vmatpush1.msra.mxu0 %v166
    %359 = vmatprep.subr.mxu0 %v175
    %360 = vmatpush1.msra.mxu0 %v174
    %361 = vmatprep.subr.mxu0 %v183
    %362 = vmatpush1.msra.mxu0 %v182
    %363 = vmatprep.subr.mxu0 %v191
    %364 = vmatpush1.msra.mxu0 %v190
    %365 = vmatprep.subr.mxu0 %v199
    %366 = vmatpush1.msra.mxu0 %v198
    %367 = vmatprep.subr.mxu0 %v207
    %368 = vmatpush1.msra.mxu0 %v206
    %369 = vmatprep.subr.mxu0 0.0
    %370 = vmatpush1.msra.mxu0 0.0
    %371 = vmatprep.subr.mxu0 0.0
    %372 = vmatpush1.msra.mxu0 0.0
    %373 = vmatprep.subr.mxu0 0.0
    %374 = vmatpush1.msra.mxu0 0.0
    %375 = vmatprep.subr.mxu0 0.0
    %376 = vmatpush1.msra.mxu0 0.0
    %377 = vmatprep.subr.mxu0 0.0
    %378 = vmatpush1.msra.mxu0 0.0
    %379 = vmatprep.subr.mxu0 0.0
    %380 = vmatpush1.msra.mxu0 0.0
    %381 = vmatprep.subr.mxu0 0.0
    %382 = vmatpush1.msra.mxu0 0.0
    %383 = vmatprep.subr.mxu0 0.0
    %384 = vmatpush1.msra.mxu0 0.0
    %385 = vmatprep.subr.mxu0 0.0
    %386 = vmatpush1.msra.mxu0 0.0
    %387 = vmatprep.subr.mxu0 0.0
    %388 = vmatpush1.msra.mxu0 0.0
    %389 = vmatprep.subr.mxu0 0.0
    %390 = vmatpush1.msra.mxu0 0.0
    %391 = vmatprep.subr.mxu0 0.0
    %392 = vmatpush1.msra.mxu0 0.0
    %393 = vmatprep.subr.mxu0 0.0
    %394 = vmatpush1.msra.mxu0 0.0
    %395 = vmatprep.subr.mxu0 0.0
    %396 = vmatpush1.msra.mxu0 0.0
    %397 = vmatprep.subr.mxu0 0.0
    %398 = vmatpush1.msra.mxu0 0.0
    %399 = vmatprep.subr.mxu0 0.0
    %400 = vmatpush1.msra.mxu0 0.0
    %401 = vmatprep.mubr.f32.mxu0 0.0
    %402 = vmatmul.mubr.f32.gmra.mrb[0].mxu0 %v81
    %v403 = vpop.f32.mrb[0].mxu0
    %v404 = vadd.f32 %v225, %v403
    %v405 = vpop.f32.mrb[0].mxu0
    %v406 = vadd.f32 %v229, %v405
    %407 = vmatprep.mubr.f32.mxu0 0.0
    %408 = vmatmul.mubr.f32.gmra.mrb[0].mxu0 %v82
    %v409 = vpop.f32.mrb[0].mxu0
    %v410 = vadd.f32 %v225, %v409
    %v411 = vpop.f32.mrb[0].mxu0
    %v412 = vadd.f32 %v229, %v411
    %413 = vmatprep.mubr.f32.mxu0 0.0
    %414 = vmatmul.mubr.f32.gmra.mrb[0].mxu0 %v83
    %v415 = vpop.f32.mrb[0].mxu0
    %v416 = vadd.f32 %v225, %v415
    %v417 = vpop.f32.mrb[0].mxu0
    %v418 = vadd.f32 %v229, %v417
    %419 = vdwg.mxu0
    %420 = vmatprep.subr.mxu0 %v89
    %421 = vmatpush1.msra.mxu0 %v88
    %422 = vmatprep.subr.mxu0 %v97
    %423 = vmatpush1.msra.mxu0 %v96
    %424 = vmatprep.subr.mxu0 %v105
    %425 = vmatpush1.msra.mxu0 %v104
    %426 = vmatprep.subr.mxu0 %v113
    %427 = vmatpush1.msra.mxu0 %v112
    %428 = vmatprep.subr.mxu0 %v121
    %429 = vmatpush1.msra.mxu0 %v120
    %430 = vmatprep.subr.mxu0 %v129
    %431 = vmatpush1.msra.mxu0 %v128
    %432 = vmatprep.subr.mxu0 %v137
    %433 = vmatpush1.msra.mxu0 %v136
    %434 = vmatprep.subr.mxu0 %v145
    %435 = vmatpush1.msra.mxu0 %v144
    %436 = vmatprep.subr.mxu0 %v153
    %437 = vmatpush1.msra.mxu0 %v152
    %438 = vmatprep.subr.mxu0 %v161
    %439 = vmatpush1.msra.mxu0 %v160
    %440 = vmatprep.subr.mxu0 %v169
    %441 = vmatpush1.msra.mxu0 %v168
    %442 = vmatprep.subr.mxu0 %v177
    %443 = vmatpush1.msra.mxu0 %v176
    %444 = vmatprep.subr.mxu0 %v185
    %445 = vmatpush1.msra.mxu0 %v184
    %446 = vmatprep.subr.mxu0 %v193
    %447 = vmatpush1.msra.mxu0 %v192
    %448 = vmatprep.subr.mxu0 %v201
    %449 = vmatpush1.msra.mxu0 %v200
    %450 = vmatprep.subr.mxu0 %v209
    %451 = vmatpush1.msra.mxu0 %v208
    %452 = vmatprep.subr.mxu0 0.0
    %453 = vmatpush1.msra.mxu0 0.0
    %454 = vmatprep.subr.mxu0 0.0
    %455 = vmatpush1.msra.mxu0 0.0
    %456 = vmatprep.subr.mxu0 0.0
    %457 = vmatpush1.msra.mxu0 0.0
    %458 = vmatprep.subr.mxu0 0.0
    %459 = vmatpush1.msra.mxu0 0.0
    %460 = vmatprep.subr.mxu0 0.0
    %461 = vmatpush1.msra.mxu0 0.0
    %462 = vmatprep.subr.mxu0 0.0
    %463 = vmatpush1.msra.mxu0 0.0
    %464 = vmatprep.subr.mxu0 0.0
    %465 = vmatpush1.msra.mxu0 0.0
    %466 = vmatprep.subr.mxu0 0.0
    %467 = vmatpush1.msra.mxu0 0.0
    %468 = vmatprep.subr.mxu0 0.0
    %469 = vmatpush1.msra.mxu0 0.0
    %470 = vmatprep.subr.mxu0 0.0
    %471 = vmatpush1.msra.mxu0 0.0
    %472 = vmatprep.subr.mxu0 0.0
    %473 = vmatpush1.msra.mxu0 0.0
    %474 = vmatprep.subr.mxu0 0.0
    %475 = vmatpush1.msra.mxu0 0.0
    %476 = vmatprep.subr.mxu0 0.0
    %477 = vmatpush1.msra.mxu0 0.0
    %478 = vmatprep.subr.mxu0 0.0
    %479 = vmatpush1.msra.mxu0 0.0
    %480 = vmatprep.subr.mxu0 0.0
    %481 = vmatpush1.msra.mxu0 0.0
    %482 = vmatprep.subr.mxu0 0.0
    %483 = vmatpush1.msra.mxu0 0.0
    %484 = vmatprep.mubr.f32.mxu0 0.0
    %485 = vmatmul.mubr.f32.gmra.mrb[0].mxu0 %v81
    %v486 = vpop.f32.mrb[0].mxu0
    %v487 = vadd.f32 %v233, %v486
    %v488 = vpop.f32.mrb[0].mxu0
    %v489 = vadd.f32 %v237, %v488
    %490 = vmatprep.mubr.f32.mxu0 0.0
    %491 = vmatmul.mubr.f32.gmra.mrb[0].mxu0 %v82
    %v492 = vpop.f32.mrb[0].mxu0
    %v493 = vadd.f32 %v233, %v492
    %v494 = vpop.f32.mrb[0].mxu0
    %v495 = vadd.f32 %v237, %v494
    %496 = vmatprep.mubr.f32.mxu0 0.0
    %497 = vmatmul.mubr.f32.gmra.mrb[0].mxu0 %v83
    %v498 = vpop.f32.mrb[0].mxu0
    %v499 = vadd.f32 %v233, %v498
    %v500 = vpop.f32.mrb[0].mxu0
    %v501 = vadd.f32 %v237, %v500
    %502 = vdwg.mxu0
    %503 = vmatprep.subr.mxu0 %v91
    %504 = vmatpush1.msra.mxu0 %v90
    %505 = vmatprep.subr.mxu0 %v99
    %506 = vmatpush1.msra.mxu0 %v98
    %507 = vmatprep.subr.mxu0 %v107
    %508 = vmatpush1.msra.mxu0 %v106
    %509 = vmatprep.subr.mxu0 %v115
    %510 = vmatpush1.msra.mxu0 %v114
    %511 = vmatprep.subr.mxu0 %v123
    %512 = vmatpush1.msra.mxu0 %v122
    %513 = vmatprep.subr.mxu0 %v131
    %514 = vmatpush1.msra.mxu0 %v130
    %515 = vmatprep.subr.mxu0 %v139
    %516 = vmatpush1.msra.mxu0 %v138
    %517 = vmatprep.subr.mxu0 %v147
    %518 = vmatpush1.msra.mxu0 %v146
    %519 = vmatprep.subr.mxu0 %v155
    %520 = vmatpush1.msra.mxu0 %v154
    %521 = vmatprep.subr.mxu0 %v163
    %522 = vmatpush1.msra.mxu0 %v162
    %523 = vmatprep.subr.mxu0 %v171
    %524 = vmatpush1.msra.mxu0 %v170
    %525 = vmatprep.subr.mxu0 %v179
    %526 = vmatpush1.msra.mxu0 %v178
    %527 = vmatprep.subr.mxu0 %v187
    %528 = vmatpush1.msra.mxu0 %v186
    %529 = vmatprep.subr.mxu0 %v195
    %530 = vmatpush1.msra.mxu0 %v194
    %531 = vmatprep.subr.mxu0 %v203
    %532 = vmatpush1.msra.mxu0 %v202
    %533 = vmatprep.subr.mxu0 %v211
    %534 = vmatpush1.msra.mxu0 %v210
    %535 = vmatprep.subr.mxu0 0.0
    %536 = vmatpush1.msra.mxu0 0.0
    %537 = vmatprep.subr.mxu0 0.0
    %538 = vmatpush1.msra.mxu0 0.0
    %539 = vmatprep.subr.mxu0 0.0
    %540 = vmatpush1.msra.mxu0 0.0
    %541 = vmatprep.subr.mxu0 0.0
    %542 = vmatpush1.msra.mxu0 0.0
    %543 = vmatprep.subr.mxu0 0.0
    %544 = vmatpush1.msra.mxu0 0.0
    %545 = vmatprep.subr.mxu0 0.0
    %546 = vmatpush1.msra.mxu0 0.0
    %547 = vmatprep.subr.mxu0 0.0
    %548 = vmatpush1.msra.mxu0 0.0
    %549 = vmatprep.subr.mxu0 0.0
    %550 = vmatpush1.msra.mxu0 0.0
    %551 = vmatprep.subr.mxu0 0.0
    %552 = vmatpush1.msra.mxu0 0.0
    %553 = vmatprep.subr.mxu0 0.0
    %554 = vmatpush1.msra.mxu0 0.0
    %555 = vmatprep.subr.mxu0 0.0
    %556 = vmatpush1.msra.mxu0 0.0
    %557 = vmatprep.subr.mxu0 0.0
    %558 = vmatpush1.msra.mxu0 0.0
    %559 = vmatprep.subr.mxu0 0.0
    %560 = vmatpush1.msra.mxu0 0.0
    %561 = vmatprep.subr.mxu0 0.0
    %562 = vmatpush1.msra.mxu0 0.0
    %563 = vmatprep.subr.mxu0 0.0
    %564 = vmatpush1.msra.mxu0 0.0
    %565 = vmatprep.subr.mxu0 0.0
    %566 = vmatpush1.msra.mxu0 0.0
    %567 = vmatprep.mubr.f32.mxu0 0.0
    %568 = vmatmul.mubr.f32.gmra.mrb[0].mxu0 %v81
    %v569 = vpop.f32.mrb[0].mxu0
    %v570 = vadd.f32 %v241, %v569
    %v571 = vpop.f32.mrb[0].mxu0
    %v572 = vadd.f32 %v245, %v571
    %573 = vmatprep.mubr.f32.mxu0 0.0
    %574 = vmatmul.mubr.f32.gmra.mrb[0].mxu0 %v82
    %v575 = vpop.f32.mrb[0].mxu0
    %v576 = vadd.f32 %v241, %v575
    %v577 = vpop.f32.mrb[0].mxu0
    %v578 = vadd.f32 %v245, %v577
    %579 = vmatprep.mubr.f32.mxu0 0.0
    %580 = vmatmul.mubr.f32.gmra.mrb[0].mxu0 %v83
    %v581 = vpop.f32.mrb[0].mxu0
    %v582 = vadd.f32 %v241, %v581
    %v583 = vpop.f32.mrb[0].mxu0
    %v584 = vadd.f32 %v245, %v583
    %585 = vdwg.mxu0
    %v586 = vmul.f32 %v487, 0.5
    %v587 = vmul.f32 %v489, 0.5
    %v588 = vmul.f32 %v570, 0.5
    %v589 = vmul.f32 %v572, 0.5
    %v590 = vmul.f32 %v493, 0.5
    %v591 = vmul.f32 %v495, 0.5
    %v592 = vmul.f32 %v576, 0.5
    %v593 = vmul.f32 %v578, 0.5
    %v594 = vmul.f32 %v499, 0.5
    %v595 = vmul.f32 %v501, 0.5
    %v596 = vmul.f32 %v582, 0.5
    %v597 = vmul.f32 %v584, 0.5
    %v598 = vmul.f32 %v487, 0.70710677
    %v599 = vmul.f32 %v489, 0.70710677
    %v600 = vmul.f32 %v570, 0.70710677
    %v601 = vmul.f32 %v572, 0.70710677
    %v602 = vmul.f32 %v493, 0.70710677
    %v603 = vmul.f32 %v495, 0.70710677
    %v604 = vmul.f32 %v576, 0.70710677
    %v605 = vmul.f32 %v578, 0.70710677
    %v606 = vmul.f32 %v499, 0.70710677
    %v607 = vmul.f32 %v501, 0.70710677
    %v608 = vmul.f32 %v582, 0.70710677
    %v609 = vmul.f32 %v584, 0.70710677
    %v610 = verf.f32.pop %v598
    %v611 = verf.f32.pop %v599
    %v612 = verf.f32.pop %v600
    %v613 = verf.f32.pop %v601
    %v614 = verf.f32.pop %v602
    %v615 = verf.f32.pop %v603
    %v616 = verf.f32.pop %v604
    %v617 = verf.f32.pop %v605
    %v618 = verf.f32.pop %v606
    %v619 = verf.f32.pop %v607
    %v620 = verf.f32.pop %v608
    %v621 = verf.f32.pop %v609
    %v622 = vadd.f32 %v610, 1.0
    %v623 = vadd.f32 %v611, 1.0
    %v624 = vadd.f32 %v612, 1.0
    %v625 = vadd.f32 %v613, 1.0
    %v626 = vadd.f32 %v614, 1.0
    %v627 = vadd.f32 %v615, 1.0
    %v628 = vadd.f32 %v616, 1.0
    %v629 = vadd.f32 %v617, 1.0
    %v630 = vadd.f32 %v618, 1.0
    %v631 = vadd.f32 %v619, 1.0
    %v632 = vadd.f32 %v620, 1.0
    %v633 = vadd.f32 %v621, 1.0
    %v634 = vmul.f32 %v586, %v622
    %v635 = vmul.f32 %v587, %v623
    %v636 = vmul.f32 %v588, %v624
    %v637 = vmul.f32 %v589, %v625
    %v638 = vmul.f32 %v590, %v626
    %v639 = vmul.f32 %v591, %v627
    %v640 = vmul.f32 %v592, %v628
    %v641 = vmul.f32 %v593, %v629
    %v642 = vmul.f32 %v594, %v630
    %v643 = vmul.f32 %v595, %v631
    %v644 = vmul.f32 %v596, %v632
    %v645 = vmul.f32 %v597, %v633
    %v646 = vmul.f32 %v321, %v634
    %v647 = vmul.f32 %v323, %v635
    %v648 = vmul.f32 %v404, %v636
    %v649 = vmul.f32 %v406, %v637
    %v650 = vmul.f32 %v327, %v638
    %v651 = vmul.f32 %v329, %v639
    %v652 = vmul.f32 %v410, %v640
    %v653 = vmul.f32 %v412, %v641
    %v654 = vmul.f32 %v333, %v642
    %v655 = vmul.f32 %v335, %v643
    %v656 = vmul.f32 %v416, %v644
    %v657 = vmul.f32 %v418, %v645
    %v658 = vld [vmem:[#allocation2] sm:$0xff]
    %v659 = vld [vmem:[#allocation2 + $0x8] sm:$0xff]
    %v660 = vld [vmem:[#allocation2 + $0x10] sm:$0xff]
    %v661 = vld [vmem:[#allocation9] sm:$0xff]
    %v662 = vld [vmem:[#allocation9 + $0x8] sm:$0xff]
    %v663 = vld [vmem:[#allocation9 + $0x10] sm:$0xff]
    %v664 = vld [vmem:[#allocation9 + $0x18] sm:$0xff]
    %v665 = vld [vmem:[#allocation9 + $0x20] sm:$0xff]
    %v666 = vld [vmem:[#allocation9 + $0x28] sm:$0xff]
    %v667 = vld [vmem:[#allocation9 + $0x30] sm:$0xff]
    %v668 = vld [vmem:[#allocation9 + $0x38] sm:$0xff]
    %v669 = vld [vmem:[#allocation9 + $0x40] sm:$0xff]
    %v670 = vld [vmem:[#allocation9 + $0x48] sm:$0xff]
    %v671 = vld [vmem:[#allocation9 + $0x50] sm:$0xff]
    %v672 = vld [vmem:[#allocation9 + $0x58] sm:$0xff]
    %v673 = vld [vmem:[#allocation9 + $0x60] sm:$0xff]
    %v674 = vld [vmem:[#allocation9 + $0x68] sm:$0xff]
    %v675 = vld [vmem:[#allocation9 + $0x70] sm:$0xff]
    %v676 = vld [vmem:[#allocation9 + $0x78] sm:$0xff]
    %v677 = vld [vmem:[#allocation9 + $0x80] sm:$0xff]
    %v678 = vld [vmem:[#allocation9 + $0x88] sm:$0xff]
    %v679 = vld [vmem:[#allocation9 + $0x90] sm:$0xff]
    %v680 = vld [vmem:[#allocation9 + $0x98] sm:$0xff]
    %v681 = vld [vmem:[#allocation9 + $0xa0] sm:$0xff]
    %v682 = vld [vmem:[#allocation9 + $0xa8] sm:$0xff]
    %v683 = vld [vmem:[#allocation9 + $0xb0] sm:$0xff]
    %v684 = vld [vmem:[#allocation9 + $0xb8] sm:$0xff]
    %v685 = vld [vmem:[#allocation9 + $0xc0] sm:$0xff]
    %v686 = vld [vmem:[#allocation9 + $0xc8] sm:$0xff]
    %v687 = vld [vmem:[#allocation9 + $0xd0] sm:$0xff]
    %v688 = vld [vmem:[#allocation9 + $0xd8] sm:$0xff]
    %v689 = vld [vmem:[#allocation9 + $0xe0] sm:$0xff]
    %v690 = vld [vmem:[#allocation9 + $0xe8] sm:$0xff]
    %v691 = vld [vmem:[#allocation9 + $0xf0] sm:$0xff]
    %v692 = vld [vmem:[#allocation9 + $0xf8] sm:$0xff]
    %v693 = vld [vmem:[#allocation9 + $0x100] sm:$0xff]
    %v694 = vld [vmem:[#allocation9 + $0x108] sm:$0xff]
    %v695 = vld [vmem:[#allocation9 + $0x110] sm:$0xff]
    %v696 = vld [vmem:[#allocation9 + $0x118] sm:$0xff]
    %v697 = vld [vmem:[#allocation9 + $0x120] sm:$0xff]
    %v698 = vld [vmem:[#allocation9 + $0x128] sm:$0xff]
    %v699 = vld [vmem:[#allocation9 + $0x130] sm:$0xff]
    %v700 = vld [vmem:[#allocation9 + $0x138] sm:$0xff]
    %v701 = vld [vmem:[#allocation9 + $0x140] sm:$0xff]
    %v702 = vld [vmem:[#allocation9 + $0x148] sm:$0xff]
    %v703 = vld [vmem:[#allocation9 + $0x150] sm:$0xff]
    %v704 = vld [vmem:[#allocation9 + $0x158] sm:$0xff]
    %v705 = vld [vmem:[#allocation9 + $0x160] sm:$0xff]
    %v706 = vld [vmem:[#allocation9 + $0x168] sm:$0xff]
    %v707 = vld [vmem:[#allocation9 + $0x170] sm:$0xff]
    %v708 = vld [vmem:[#allocation9 + $0x178] sm:$0xff]
    %v709 = vld [vmem:[#allocation9 + $0x180] sm:$0xff]
    %v710 = vld [vmem:[#allocation9 + $0x188] sm:$0xff]
    %v711 = vld [vmem:[#allocation9 + $0x190] sm:$0xff]
    %v712 = vld [vmem:[#allocation9 + $0x198] sm:$0xff]
    %v713 = vld [vmem:[#allocation9 + $0x1a0] sm:$0xff]
    %v714 = vld [vmem:[#allocation9 + $0x1a8] sm:$0xff]
    %v715 = vld [vmem:[#allocation9 + $0x1b0] sm:$0xff]
    %v716 = vld [vmem:[#allocation9 + $0x1b8] sm:$0xff]
    %v717 = vld [vmem:[#allocation9 + $0x1c0] sm:$0xff]
    %v718 = vld [vmem:[#allocation9 + $0x1c8] sm:$0xff]
    %v719 = vld [vmem:[#allocation9 + $0x1d0] sm:$0xff]
    %v720 = vld [vmem:[#allocation9 + $0x1d8] sm:$0xff]
    %v721 = vld [vmem:[#allocation9 + $0x1e0] sm:$0xff]
    %v722 = vld [vmem:[#allocation9 + $0x1e8] sm:$0xff]
    %v723 = vld [vmem:[#allocation9 + $0x1f0] sm:$0xff]
    %v724 = vld [vmem:[#allocation9 + $0x1f8] sm:$0xff]
    %725 = vmatprep.subr.mxu0 0.0
    %726 = vmatpush1.msra.mxu0 %v661
    %727 = vmatprep.subr.mxu0 0.0
    %728 = vmatpush1.msra.mxu0 %v662
    %729 = vmatprep.subr.mxu0 0.0
    %730 = vmatpush1.msra.mxu0 %v663
    %731 = vmatprep.subr.mxu0 0.0
    %732 = vmatpush1.msra.mxu0 %v664
    %733 = vmatprep.subr.mxu0 0.0
    %734 = vmatpush1.msra.mxu0 %v665
    %735 = vmatprep.subr.mxu0 0.0
    %736 = vmatpush1.msra.mxu0 %v666
    %737 = vmatprep.subr.mxu0 0.0
    %738 = vmatpush1.msra.mxu0 %v667
    %739 = vmatprep.subr.mxu0 0.0
    %740 = vmatpush1.msra.mxu0 %v668
    %741 = vmatprep.subr.mxu0 0.0
    %742 = vmatpush1.msra.mxu0 %v669
    %743 = vmatprep.subr.mxu0 0.0
    %744 = vmatpush1.msra.mxu0 %v670
    %745 = vmatprep.subr.mxu0 0.0
    %746 = vmatpush1.msra.mxu0 %v671
    %747 = vmatprep.subr.mxu0 0.0
    %748 = vmatpush1.msra.mxu0 %v672
    %749 = vmatprep.subr.mxu0 0.0
    %750 = vmatpush1.msra.mxu0 %v673
    %751 = vmatprep.subr.mxu0 0.0
    %752 = vmatpush1.msra.mxu0 %v674
    %753 = vmatprep.subr.mxu0 0.0
    %754 = vmatpush1.msra.mxu0 %v675
    %755 = vmatprep.subr.mxu0 0.0
    %756 = vmatpush1.msra.mxu0 %v676
    %757 = vmatprep.subr.mxu0 0.0
    %758 = vmatpush1.msra.mxu0 %v677
    %759 = vmatprep.subr.mxu0 0.0
    %760 = vmatpush1.msra.mxu0 %v678
    %761 = vmatprep.subr.mxu0 0.0
    %762 = vmatpush1.msra.mxu0 %v679
    %763 = vmatprep.subr.mxu0 0.0
    %764 = vmatpush1.msra.mxu0 %v680
    %765 = vmatprep.subr.mxu0 0.0
    %766 = vmatpush1.msra.mxu0 %v681
    %767 = vmatprep.subr.mxu0 0.0
    %768 = vmatpush1.msra.mxu0 %v682
    %769 = vmatprep.subr.mxu0 0.0
    %770 = vmatpush1.msra.mxu0 %v683
    %771 = vmatprep.subr.mxu0 0.0
    %772 = vmatpush1.msra.mxu0 %v684
    %773 = vmatprep.subr.mxu0 0.0
    %774 = vmatpush1.msra.mxu0 %v685
    %775 = vmatprep.subr.mxu0 0.0
    %776 = vmatpush1.msra.mxu0 %v686
    %777 = vmatprep.subr.mxu0 0.0
    %778 = vmatpush1.msra.mxu0 %v687
    %779 = vmatprep.subr.mxu0 0.0
    %780 = vmatpush1.msra.mxu0 %v688
    %781 = vmatprep.subr.mxu0 0.0
    %782 = vmatpush1.msra.mxu0 %v689
    %783 = vmatprep.subr.mxu0 0.0
    %784 = vmatpush1.msra.mxu0 %v690
    %785 = vmatprep.subr.mxu0 0.0
    %786 = vmatpush1.msra.mxu0 %v691
    %787 = vmatprep.subr.mxu0 0.0
    %788 = vmatpush1.msra.mxu0 %v692
    %789 = vmatprep.mubr.f32.mxu0 %v647
    %790 = vmatmul.mubr.f32.gmra.mrb[0].mxu0 %v646
    %v791 = vpop.f32.mrb[0].mxu0
    %v792 = vadd.f32 0.0, %v791
    %v793 = vpop.f32.mrb[0].mxu0
    %794 = vmatprep.mubr.f32.mxu0 %v651
    %795 = vmatmul.mubr.f32.gmra.mrb[0].mxu0 %v650
    %v796 = vpop.f32.mrb[0].mxu0
    %v797 = vadd.f32 0.0, %v796
    %v798 = vpop.f32.mrb[0].mxu0
    %799 = vmatprep.mubr.f32.mxu0 %v655
    %800 = vmatmul.mubr.f32.gmra.mrb[0].mxu0 %v654
    %v801 = vpop.f32.mrb[0].mxu0
    %v802 = vadd.f32 0.0, %v801
    %v803 = vpop.f32.mrb[0].mxu0
    %804 = vdwg.mxu0
    %805 = vmatprep.subr.mxu0 0.0
    %806 = vmatpush1.msra.mxu0 %v693
    %807 = vmatprep.subr.mxu0 0.0
    %808 = vmatpush1.msra.mxu0 %v694
    %809 = vmatprep.subr.mxu0 0.0
    %810 = vmatpush1.msra.mxu0 %v695
    %811 = vmatprep.subr.mxu0 0.0
    %812 = vmatpush1.msra.mxu0 %v696
    %813 = vmatprep.subr.mxu0 0.0
    %814 = vmatpush1.msra.mxu0 %v697
    %815 = vmatprep.subr.mxu0 0.0
    %816 = vmatpush1.msra.mxu0 %v698
    %817 = vmatprep.subr.mxu0 0.0
    %818 = vmatpush1.msra.mxu0 %v699
    %819 = vmatprep.subr.mxu0 0.0
    %820 = vmatpush1.msra.mxu0 %v700
    %821 = vmatprep.subr.mxu0 0.0
    %822 = vmatpush1.msra.mxu0 %v701
    %823 = vmatprep.subr.mxu0 0.0
    %824 = vmatpush1.msra.mxu0 %v702
    %825 = vmatprep.subr.mxu0 0.0
    %826 = vmatpush1.msra.mxu0 %v703
    %827 = vmatprep.subr.mxu0 0.0
    %828 = vmatpush1.msra.mxu0 %v704
    %829 = vmatprep.subr.mxu0 0.0
    %830 = vmatpush1.msra.mxu0 %v705
    %831 = vmatprep.subr.mxu0 0.0
    %832 = vmatpush1.msra.mxu0 %v706
    %833 = vmatprep.subr.mxu0 0.0
    %834 = vmatpush1.msra.mxu0 %v707
    %835 = vmatprep.subr.mxu0 0.0
    %836 = vmatpush1.msra.mxu0 %v708
    %837 = vmatprep.subr.mxu0 0.0
    %838 = vmatpush1.msra.mxu0 %v709
    %839 = vmatprep.subr.mxu0 0.0
    %840 = vmatpush1.msra.mxu0 %v710
    %841 = vmatprep.subr.mxu0 0.0
    %842 = vmatpush1.msra.mxu0 %v711
    %843 = vmatprep.subr.mxu0 0.0
    %844 = vmatpush1.msra.mxu0 %v712
    %845 = vmatprep.subr.mxu0 0.0
    %846 = vmatpush1.msra.mxu0 %v713
    %847 = vmatprep.subr.mxu0 0.0
    %848 = vmatpush1.msra.mxu0 %v714
    %849 = vmatprep.subr.mxu0 0.0
    %850 = vmatpush1.msra.mxu0 %v715
    %851 = vmatprep.subr.mxu0 0.0
    %852 = vmatpush1.msra.mxu0 %v716
    %853 = vmatprep.subr.mxu0 0.0
    %854 = vmatpush1.msra.mxu0 %v717
    %855 = vmatprep.subr.mxu0 0.0
    %856 = vmatpush1.msra.mxu0 %v718
    %857 = vmatprep.subr.mxu0 0.0
    %858 = vmatpush1.msra.mxu0 %v719
    %859 = vmatprep.subr.mxu0 0.0
    %860 = vmatpush1.msra.mxu0 %v720
    %861 = vmatprep.subr.mxu0 0.0
    %862 = vmatpush1.msra.mxu0 %v721
    %863 = vmatprep.subr.mxu0 0.0
    %864 = vmatpush1.msra.mxu0 %v722
    %865 = vmatprep.subr.mxu0 0.0
    %866 = vmatpush1.msra.mxu0 %v723
    %867 = vmatprep.subr.mxu0 0.0
    %868 = vmatpush1.msra.mxu0 %v724
    %869 = vmatprep.mubr.f32.mxu0 %v649
    %870 = vmatmul.mubr.f32.gmra.mrb[0].mxu0 %v648
    %v871 = vpop.f32.mrb[0].mxu0
    %v872 = vadd.f32 %v792, %v871
    %v873 = vpop.f32.mrb[0].mxu0
    %874 = vmatprep.mubr.f32.mxu0 %v653
    %875 = vmatmul.mubr.f32.gmra.mrb[0].mxu0 %v652
    %v876 = vpop.f32.mrb[0].mxu0
    %v877 = vadd.f32 %v797, %v876
    %v878 = vpop.f32.mrb[0].mxu0
    %879 = vmatprep.mubr.f32.mxu0 %v657
    %880 = vmatmul.mubr.f32.gmra.mrb[0].mxu0 %v656
    %v881 = vpop.f32.mrb[0].mxu0
    %v882 = vadd.f32 %v802, %v881
    %v883 = vpop.f32.mrb[0].mxu0
    %884 = vdwg.mxu0
    %v885 = vadd.f32 %v658, %v872
    %v886 = vadd.f32 %v659, %v877
    %v887 = vadd.f32 %v660, %v882
    %888 = vst [vmem:[#allocation2] sm:$0xff] %v885
    %889 = vst [vmem:[#allocation2 + $0x8] sm:$0xff] %v886
    %890 = vst [vmem:[#allocation2 + $0x10] sm:$0xff] %v887
    // Predicated region
    $region42: #{tpu_custom_call.1} parent=1 // pred_check
      %p891 = pneg %p74
    $region43: #{tpu_custom_call.1} parent=1 // pred_check_branch
      %893 = sbr.rel (%p891) target = $region45
    $region44: #{tpu_custom_call.1} parent=1 // pred_region
      %v894 = vld [vmem:[#allocation2] sm:$0xff]
      %v895 = vld [vmem:[#allocation2 + $0x8] sm:$0xff]
      %v896 = vld [vmem:[#allocation2 + $0x10] sm:$0xff]
      %v897 = vld [vmem:[%s4] sm:$0x1]
      %v899 = vlaneseq
      %v900 = vshrl.u32 %v899, 7
      %v901 = vsub.s32 0, %v900
      %v902 = vrot.slane %v897, %v901
      %v904 = vadd.f32 %v894, %v902
      %v905 = vadd.f32 %v895, %v902
      %v906 = vadd.f32 %v896, %v902
      %907 = vst [vmem:[#allocation11] sm:$0xff] %v904
      %908 = vst [vmem:[#allocation11 + $0x8] sm:$0xff] %v905
      %909 = vst [vmem:[#allocation11 + $0x10] sm:$0xff] %v906
    $region45: #{tpu_custom_call.1} parent=1 // pred_fallthru
      _
    // Predicated region
    $region46: #{tpu_custom_call.1} parent=1 // pred_check
      _
    $region47: #{tpu_custom_call.1} parent=1 // pred_check_branch
      %911 = sbr.rel (0) target = $region49
    $region48: #{tpu_custom_call.1} parent=1 // pred_region
      %s913 = ssub.s32 384, 384
      %914 = vsyncadd [#allocation5], %s913
      %s915 = sshll.u32 [#allocation11], 4
      %s916 = int_to_ptr.vmem [resolvable:$true] %s915
      %921 = dma.vmem_to_hbm [thread:$0]  %s916, 384, %s5, [#allocation5], 128, 128, 8
    $region49: #{tpu_custom_call.1} parent=1 // pred_fallthru
      _
    // Predicated region
    $region50: #{tpu_custom_call.1} parent=1 // pred_check
      _
    $region51: #{tpu_custom_call.1} parent=1 // pred_check_branch
      %923 = sbr.rel (0) target = $region53
    $region52: #{tpu_custom_call.1} parent=1 // pred_region
      %924 = dma.done [#allocation5], 384
    $region53: #{tpu_custom_call.1} parent=1 // pred_fallthru
      _
    %925 = vsyncpa [#allocation4], 1
    %926 = vsyncpa [#allocation7], 1
    %927 = vsyncpa [#allocation10], 1
    %928 = vsyncpa [#allocation5], 1

</llo_original>
